<compile_context>
chip_gen: v7x
topology: tpu7x:2x2x1
jax: 0.10.0
libtpu: 0.0.40
codegen_flags: <defaults>
</compile_context>

<pallas_src>
import functools
import math

import jax
import jax.numpy as jnp
from jax import lax
from jax.experimental import pallas as pl
from jax.experimental.pallas import tpu as pltpu


def _simclr_kernel(f1rT_ref, f2rT_ref, f1c_ref, f2c_ref,   # inputs
                   o1_ref, o2_ref,                          # per-row loss terms
                   tot1, tot2, diag1, diag2, pos,           # (1, T) VMEM scratch
                   *, inv_t, margin_factor, n_valid):
    i = pl.program_id(0)
    j = pl.program_id(1)
    nj = pl.num_programs(1)
    t = o1_ref.shape[1]

    @pl.when(j == 0)
    def _():
        tot1[...] = jnp.zeros_like(tot1)
        tot2[...] = jnp.zeros_like(tot2)

    f1rT = f1rT_ref[...]   # (D, T) bf16, row block i (transposed), resident across j
    f2rT = f2rT_ref[...]   # (D, T) bf16
    f1c = f1c_ref[...]     # (T, D) bf16, column block j (streamed)
    f2c = f2c_ref[...]     # (T, D) bf16

    # g_xy[b, a] = <features_x[j*t+b], features_y[i*t+a]>   ("our" rows -> lanes)
    # bf16 operands, f32 accumulation: one MXU pass (no 6x HIGHEST emulation).
    g11 = jnp.dot(f1c, f1rT, preferred_element_type=jnp.float32)
    g21 = jnp.dot(f2c, f1rT, preferred_element_type=jnp.float32)  # pos pairs for f1 rows
    g12 = jnp.dot(f1c, f2rT, preferred_element_type=jnp.float32)  # pos pairs for f2 rows
    g22 = jnp.dot(f2c, f2rT, preferred_element_type=jnp.float32)

    # 1/temperature fused into the exp argument (VALU, hidden under EUP exp).
    e11 = jnp.exp(g11 * inv_t)
    e21 = jnp.exp(g21 * inv_t)
    e12 = jnp.exp(g12 * inv_t)
    e22 = jnp.exp(g22 * inv_t)

    # One VALU add replaces one cross-sublane reduce per row half.
    s1 = e11 + e21   # denominators for features1 rows
    s2 = e12 + e22   # denominators for features2 rows
    if n_valid % t != 0:   # static: mask padded similarity columns of the last block
        col_ok = (lax.broadcasted_iota(jnp.int32, (t, 1), 0) + j * t) < n_valid
        s1 = jnp.where(col_ok, s1, 0.0)
        s2 = jnp.where(col_ok, s2, 0.0)

    tot1[...] += jnp.sum(s1, axis=0, keepdims=True)
    tot2[...] += jnp.sum(s2, axis=0, keepdims=True)

    # Diagonal / positive-pair entries only exist in the i == j tile; it always
    # precedes the j == nj-1 finalize within each row block's j sweep.
    @pl.when(i == j)
    def _():
        eye = (lax.broadcasted_iota(jnp.int32, (t, t), 0)
               == lax.broadcasted_iota(jnp.int32, (t, t), 1))
        # jnp.where (select) instead of multiply: padded garbage never makes 0*inf.
        diag1[...] = jnp.sum(jnp.where(eye, e11, 0.0), axis=0, keepdims=True)
        diag2[...] = jnp.sum(jnp.where(eye, e22, 0.0), axis=0, keepdims=True)
        pos[...] = jnp.sum(jnp.where(eye, e21, 0.0), axis=0, keepdims=True)

    @pl.when(j == nj - 1)
    def _():
        p = pos[...] * margin_factor                       # exp((sim_pos - margin)/T)
        o1_ref[...] = jnp.log(1.0 + (tot1[...] - diag1[...] - pos[...]) / p)
        o2_ref[...] = jnp.log(1.0 + (tot2[...] - diag2[...] - pos[...]) / p)


def _pick_tile(n, target=512):
    """Lane/MXU-aligned row tile.  cdiv grid + in-kernel masking handle any n."""
    if n >= 2 * target:
        return target
    if n >= 256:
        # >= 2 row blocks so the "parallel" axis can span both v7x TensorCores.
        half = -(-n // 2)
        return min(-(-half // 128) * 128, target)
    return n   # small problem: one full-extent block (always a legal BlockSpec)


def simclr_loss(features1, features2, temperature=0.5, margin=0.0, label=None,
                block_rows=None):
    assert label is None  # TODO(synk): label-mask path not implemented
    n, d = features1.shape
    assert features2.shape == (n, d)

    t = _pick_tile(n) if block_rows is None else int(block_rows)
    num_blk = -(-n // t)
    grid = (num_blk, num_blk)

    # bf16 operands: native single-pass MXU, half the HBM->VMEM bytes.  Row-side
    # operands are pre-transposed to (D, N) so the kernel's dots are plain
    # (M,K)x(K,N) and per-row results are lane-oriented.
    f1c = features1.astype(jnp.bfloat16)
    f2c = features2.astype(jnp.bfloat16)
    f1rT = f1c.T
    f2rT = f2c.T

    kernel = functools.partial(
        _simclr_kernel,
        inv_t=float(1.0 / temperature),
        margin_factor=float(math.exp(-margin / temperature)),
        n_valid=n,
    )

    rowT_spec = pl.BlockSpec((d, t), lambda i, j: (0, i))   # resident across j
    col_spec = pl.BlockSpec((t, d), lambda i, j: (j, 0))    # streamed over j
    out_spec = pl.BlockSpec((1, t), lambda i, j: (i, 0))    # lane-dense per-row loss

    o1, o2 = pl.pallas_call(
        kernel,
        out_shape=(jax.ShapeDtypeStruct((num_blk, t), jnp.float32),
                   jax.ShapeDtypeStruct((num_blk, t), jnp.float32)),
        grid_spec=pltpu.PrefetchScalarGridSpec(
            num_scalar_prefetch=0,
            grid=grid,
            in_specs=[rowT_spec, rowT_spec, col_spec, col_spec],
            out_specs=[out_spec, out_spec],
            scratch_shapes=[pltpu.VMEM((1, t), jnp.float32) for _ in range(5)],
        ),
        compiler_params=pltpu.CompilerParams(
            dimension_semantics=("parallel", "arbitrary")),
    )(f1rT, f2rT, f1c, f2c)

    # Tiny epilogue: mean over the 2n valid per-row loss terms.
    o = jnp.concatenate([o1.reshape(-1), o2.reshape(-1)])
    if num_blk * t == n:
        return jnp.mean(o)
    valid = jnp.arange(num_blk * t) < n
    valid = jnp.concatenate([valid, valid])
    return jnp.sum(jnp.where(valid, o, 0.0)) / (2.0 * n)


def _reference(features1, features2, temperature=0.5, margin=0.0):
    # Pure-JAX (f32) reference mirroring the PyTorch module (label=None).
    n = features1.shape[0]
    features = jnp.concatenate([features1, features2], axis=0)
    sim = jnp.dot(features, features.T, precision=jax.lax.Precision.HIGHEST)
    eye1 = jnp.tile(jnp.eye(n), (2, 2))
    eye2 = eye1 - jnp.eye(2 * n)
    s = jnp.exp((sim - margin * eye2) / temperature)
    pos = jnp.sum(eye2 * s, axis=1)
    neg = jnp.sum((1.0 - eye1) * s, axis=1)
    return jnp.mean(jnp.log(1.0 + neg / pos))


if __name__ == "__main__":
    key = jax.random.PRNGKey(0)

    def make(n, d, salt):
        k1, k2 = jax.random.split(jax.random.fold_in(key, salt))
        f1 = jax.random.normal(k1, (n, d), dtype=jnp.float32)
        f2 = jax.random.normal(k2, (n, d), dtype=jnp.float32)
        # SimCLR consumes L2-normalized projections; also keeps exp(sim/T) finite.
        f1 = f1 / jnp.linalg.norm(f1, axis=1, keepdims=True)
        f2 = f2 / jnp.linalg.norm(f2, axis=1, keepdims=True)
        return f1, f2

    # (n, d, forced tile, temperature, margin) — covers the single-block path,
    # the cdiv+masked multi-block path, and the multi-block divisible path.
    cases = [
        (16, 32, None, 0.5, 0.0),
        (16, 32, None, 0.5, 0.25),
        (200, 32, 128, 0.5, 0.25),
        (256, 64, None, 0.5, 0.0),
    ]
    for (n, d, tile, temp, marg) in cases:
        f1, f2 = make(n, d, salt=n * 1000 + d)
        loss = jax.block_until_ready(
            simclr_loss(f1, f2, temperature=temp, margin=marg, block_rows=tile))
        ref = _reference(f1, f2, temperature=temp, margin=marg)
        # Tolerance leaves headroom for the bf16 MXU operands vs the f32 reference.
        assert jnp.allclose(loss, ref, rtol=2e-2, atol=1e-3), (
            n, d, tile, temp, marg, loss, ref)

    print("KERNEL_OK")
</pallas_src>

<mosaic_0001>
module attributes {stable_mosaic.version = 11 : i64} {
  func.func @_simclr_kernel(%arg0: i32, %arg1: i32, %arg2: memref<32x16xbf16, #tpu.memory_space<vmem>>, %arg3: memref<32x16xbf16, #tpu.memory_space<vmem>>, %arg4: memref<16x32xbf16, #tpu.memory_space<vmem>>, %arg5: memref<16x32xbf16, #tpu.memory_space<vmem>>, %arg6: memref<1x16xf32, #tpu.memory_space<vmem>>, %arg7: memref<1x16xf32, #tpu.memory_space<vmem>>, %arg8: memref<1x16xf32, #tpu.memory_space<vmem>>, %arg9: memref<1x16xf32, #tpu.memory_space<vmem>>, %arg10: memref<1x16xf32, #tpu.memory_space<vmem>>, %arg11: memref<1x16xf32, #tpu.memory_space<vmem>>, %arg12: memref<1x16xf32, #tpu.memory_space<vmem>>) attributes {dimension_semantics = [#tpu.dimension_semantics<parallel>, #tpu.dimension_semantics<arbitrary>], iteration_bounds = array<i64: 1, 1>, scalar_prefetch = 0 : i64, scratch_operands = 5 : i64, tpu.core_type = #tpu.core_type<tc>, window_params = [{transform_indices = @transform_0, window_bounds = array<i64: 32, 16>}, {transform_indices = @transform_1, window_bounds = array<i64: 32, 16>}, {transform_indices = @transform_2, window_bounds = array<i64: 16, 32>}, {transform_indices = @transform_3, window_bounds = array<i64: 16, 32>}, {transform_indices = @transform_4, window_bounds = array<i64: 1, 16>}, {transform_indices = @transform_5, window_bounds = array<i64: 1, 16>}]} {
    %c0_i32 = arith.constant 0 : i32
    %0 = arith.cmpi eq, %arg1, %c0_i32 : i32
    %1 = arith.extui %0 : i1 to i32
    %c0_i32_0 = arith.constant 0 : i32
    %2 = arith.cmpi ne, %1, %c0_i32_0 : i32
    scf.if %2 {
      %cst_28 = arith.constant 0.000000e+00 : f32
      %41 = vector.broadcast %cst_28 : f32 to vector<1x16xf32>
      %c0_29 = arith.constant 0 : index
      %c0_30 = arith.constant 0 : index
      %42 = vector.load %arg8[%c0_29, %c0_30] : memref<1x16xf32, #tpu.memory_space<vmem>>, vector<1x16xf32>
      tpu.vector_store %arg8[%c0_29, %c0_30], %41 {strides = array<i32>} : memref<1x16xf32, #tpu.memory_space<vmem>>, vector<1x16xf32>,
      %cst_31 = arith.constant 0.000000e+00 : f32
      %43 = vector.broadcast %cst_31 : f32 to vector<1x16xf32>
      %c0_32 = arith.constant 0 : index
      %c0_33 = arith.constant 0 : index
      %44 = vector.load %arg9[%c0_32, %c0_33] : memref<1x16xf32, #tpu.memory_space<vmem>>, vector<1x16xf32>
      tpu.vector_store %arg9[%c0_32, %c0_33], %43 {strides = array<i32>} : memref<1x16xf32, #tpu.memory_space<vmem>>, vector<1x16xf32>,
    } else {
    }
    %c0 = arith.constant 0 : index
    %c0_1 = arith.constant 0 : index
    %3 = vector.load %arg2[%c0, %c0_1] : memref<32x16xbf16, #tpu.memory_space<vmem>>, vector<32x16xbf16>
    %c0_2 = arith.constant 0 : index
    %c0_3 = arith.constant 0 : index
    %4 = vector.load %arg3[%c0_2, %c0_3] : memref<32x16xbf16, #tpu.memory_space<vmem>>, vector<32x16xbf16>
    %c0_4 = arith.constant 0 : index
    %c0_5 = arith.constant 0 : index
    %5 = vector.load %arg4[%c0_4, %c0_5] : memref<16x32xbf16, #tpu.memory_space<vmem>>, vector<16x32xbf16>
    %c0_6 = arith.constant 0 : index
    %c0_7 = arith.constant 0 : index
    %6 = vector.load %arg5[%c0_6, %c0_7] : memref<16x32xbf16, #tpu.memory_space<vmem>>, vector<16x32xbf16>
    %cst = arith.constant dense<0.000000e+00> : vector<16x16xf32>
    %7 = tpu.matmul %5, %3, %cst {dimension_numbers = #tpu.dot_dimension_numbers<[1], [0], [0], [1], [0, 0, 1, 1], [], []>} : vector<16x32xbf16>, vector<32x16xbf16>, vector<16x16xf32> -> vector<16x16xf32>
    %cst_8 = arith.constant dense<0.000000e+00> : vector<16x16xf32>
    %8 = tpu.matmul %6, %3, %cst_8 {dimension_numbers = #tpu.dot_dimension_numbers<[1], [0], [0], [1], [0, 0, 1, 1], [], []>} : vector<16x32xbf16>, vector<32x16xbf16>, vector<16x16xf32> -> vector<16x16xf32>
    %cst_9 = arith.constant dense<0.000000e+00> : vector<16x16xf32>
    %9 = tpu.matmul %5, %4, %cst_9 {dimension_numbers = #tpu.dot_dimension_numbers<[1], [0], [0], [1], [0, 0, 1, 1], [], []>} : vector<16x32xbf16>, vector<32x16xbf16>, vector<16x16xf32> -> vector<16x16xf32>
    %cst_10 = arith.constant dense<0.000000e+00> : vector<16x16xf32>
    %10 = tpu.matmul %6, %4, %cst_10 {dimension_numbers = #tpu.dot_dimension_numbers<[1], [0], [0], [1], [0, 0, 1, 1], [], []>} : vector<16x32xbf16>, vector<32x16xbf16>, vector<16x16xf32> -> vector<16x16xf32>
    %cst_11 = arith.constant 2.000000e+00 : f32
    %11 = vector.broadcast %cst_11 : f32 to vector<16x16xf32>
    %12 = arith.mulf %7, %11 : vector<16x16xf32>
    %13 = math.exp %12 : vector<16x16xf32>
    %cst_12 = arith.constant 2.000000e+00 : f32
    %14 = vector.broadcast %cst_12 : f32 to vector<16x16xf32>
    %15 = arith.mulf %8, %14 : vector<16x16xf32>
    %16 = math.exp %15 : vector<16x16xf32>
    %cst_13 = arith.constant 2.000000e+00 : f32
    %17 = vector.broadcast %cst_13 : f32 to vector<16x16xf32>
    %18 = arith.mulf %9, %17 : vector<16x16xf32>
    %19 = math.exp %18 : vector<16x16xf32>
    %cst_14 = arith.constant 2.000000e+00 : f32
    %20 = vector.broadcast %cst_14 : f32 to vector<16x16xf32>
    %21 = arith.mulf %10, %20 : vector<16x16xf32>
    %22 = math.exp %21 : vector<16x16xf32>
    %23 = arith.addf %13, %16 : vector<16x16xf32>
    %24 = arith.addf %19, %22 : vector<16x16xf32>
    %c0_15 = arith.constant 0 : index
    %c0_16 = arith.constant 0 : index
    %25 = vector.load %arg8[%c0_15, %c0_16] : memref<1x16xf32, #tpu.memory_space<vmem>>, vector<1x16xf32>
    %cst_17 = arith.constant dense<0.000000e+00> : vector<16xf32>
    %26 = vector.multi_reduction <add>, %23, %cst_17 [0] : vector<16x16xf32> to vector<16xf32>
    %27 = vector.shape_cast %26 : vector<16xf32> to vector<1x16xf32>
    %28 = arith.addf %25, %27 : vector<1x16xf32>
    %c0_18 = arith.constant 0 : index
    %c0_19 = arith.constant 0 : index
    %29 = vector.load %arg8[%c0_18, %c0_19] : memref<1x16xf32, #tpu.memory_space<vmem>>, vector<1x16xf32>
    tpu.vector_store %arg8[%c0_18, %c0_19], %28 {strides = array<i32>} : memref<1x16xf32, #tpu.memory_space<vmem>>, vector<1x16xf32>,
    %c0_20 = arith.constant 0 : index
    %c0_21 = arith.constant 0 : index
    %30 = vector.load %arg9[%c0_20, %c0_21] : memref<1x16xf32, #tpu.memory_space<vmem>>, vector<1x16xf32>
    %cst_22 = arith.constant dense<0.000000e+00> : vector<16xf32>
    %31 = vector.multi_reduction <add>, %24, %cst_22 [0] : vector<16x16xf32> to vector<16xf32>
    %32 = vector.shape_cast %31 : vector<16xf32> to vector<1x16xf32>
    %33 = arith.addf %30, %32 : vector<1x16xf32>
    %c0_23 = arith.constant 0 : index
    %c0_24 = arith.constant 0 : index
    %34 = vector.load %arg9[%c0_23, %c0_24] : memref<1x16xf32, #tpu.memory_space<vmem>>, vector<1x16xf32>
    tpu.vector_store %arg9[%c0_23, %c0_24], %33 {strides = array<i32>} : memref<1x16xf32, #tpu.memory_space<vmem>>, vector<1x16xf32>,
    %35 = arith.cmpi eq, %arg0, %arg1 : i32
    %36 = arith.extui %35 : i1 to i32
    %c0_i32_25 = arith.constant 0 : i32
    %37 = arith.cmpi ne, %36, %c0_i32_25 : i32
    scf.if %37 {
      %41 = tpu.iota {dimensions = array<i32: 0>} : vector<16x16xi32>
      %42 = tpu.iota {dimensions = array<i32: 1>} : vector<16x16xi32>
      %43 = arith.cmpi eq, %41, %42 : vector<16x16xi32>
      %cst_28 = arith.constant 0.000000e+00 : f32
      %44 = vector.broadcast %cst_28 : f32 to vector<16x16xf32>
      %45 = arith.select %43, %13, %44 : vector<16x16xi1>, vector<16x16xf32>
      %cst_29 = arith.constant dense<0.000000e+00> : vector<16xf32>
      %46 = vector.multi_reduction <add>, %45, %cst_29 [0] : vector<16x16xf32> to vector<16xf32>
      %47 = vector.shape_cast %46 : vector<16xf32> to vector<1x16xf32>
      %c0_30 = arith.constant 0 : index
      %c0_31 = arith.constant 0 : index
      %48 = vector.load %arg10[%c0_30, %c0_31] : memref<1x16xf32, #tpu.memory_space<vmem>>, vector<1x16xf32>
      tpu.vector_store %arg10[%c0_30, %c0_31], %47 {strides = array<i32>} : memref<1x16xf32, #tpu.memory_space<vmem>>, vector<1x16xf32>,
      %cst_32 = arith.constant 0.000000e+00 : f32
      %49 = vector.broadcast %cst_32 : f32 to vector<16x16xf32>
      %50 = arith.select %43, %22, %49 : vector<16x16xi1>, vector<16x16xf32>
      %cst_33 = arith.constant dense<0.000000e+00> : vector<16xf32>
      %51 = vector.multi_reduction <add>, %50, %cst_33 [0] : vector<16x16xf32> to vector<16xf32>
      %52 = vector.shape_cast %51 : vector<16xf32> to vector<1x16xf32>
      %c0_34 = arith.constant 0 : index
      %c0_35 = arith.constant 0 : index
      %53 = vector.load %arg11[%c0_34, %c0_35] : memref<1x16xf32, #tpu.memory_space<vmem>>, vector<1x16xf32>
      tpu.vector_store %arg11[%c0_34, %c0_35], %52 {strides = array<i32>} : memref<1x16xf32, #tpu.memory_space<vmem>>, vector<1x16xf32>,
      %cst_36 = arith.constant 0.000000e+00 : f32
      %54 = vector.broadcast %cst_36 : f32 to vector<16x16xf32>
      %55 = arith.select %43, %16, %54 : vector<16x16xi1>, vector<16x16xf32>
      %cst_37 = arith.constant dense<0.000000e+00> : vector<16xf32>
      %56 = vector.multi_reduction <add>, %55, %cst_37 [0] : vector<16x16xf32> to vector<16xf32>
      %57 = vector.shape_cast %56 : vector<16xf32> to vector<1x16xf32>
      %c0_38 = arith.constant 0 : index
      %c0_39 = arith.constant 0 : index
      %58 = vector.load %arg12[%c0_38, %c0_39] : memref<1x16xf32, #tpu.memory_space<vmem>>, vector<1x16xf32>
      tpu.vector_store %arg12[%c0_38, %c0_39], %57 {strides = array<i32>} : memref<1x16xf32, #tpu.memory_space<vmem>>, vector<1x16xf32>,
    } else {
    }
    %c0_i32_26 = arith.constant 0 : i32
    %38 = arith.cmpi eq, %arg1, %c0_i32_26 : i32
    %39 = arith.extui %38 : i1 to i32
    %c0_i32_27 = arith.constant 0 : i32
    %40 = arith.cmpi ne, %39, %c0_i32_27 : i32
    scf.if %40 {
      %c0_28 = arith.constant 0 : index
      %c0_29 = arith.constant 0 : index
      %41 = vector.load %arg12[%c0_28, %c0_29] : memref<1x16xf32, #tpu.memory_space<vmem>>, vector<1x16xf32>
      %cst_30 = arith.constant 1.000000e+00 : f32
      %42 = vector.broadcast %cst_30 : f32 to vector<1x16xf32>
      %43 = arith.mulf %41, %42 : vector<1x16xf32>
      %c0_31 = arith.constant 0 : index
      %c0_32 = arith.constant 0 : index
      %44 = vector.load %arg8[%c0_31, %c0_32] : memref<1x16xf32, #tpu.memory_space<vmem>>, vector<1x16xf32>
      %c0_33 = arith.constant 0 : index
      %c0_34 = arith.constant 0 : index
      %45 = vector.load %arg10[%c0_33, %c0_34] : memref<1x16xf32, #tpu.memory_space<vmem>>, vector<1x16xf32>
      %46 = arith.subf %44, %45 : vector<1x16xf32>
      %c0_35 = arith.constant 0 : index
      %c0_36 = arith.constant 0 : index
      %47 = vector.load %arg12[%c0_35, %c0_36] : memref<1x16xf32, #tpu.memory_space<vmem>>, vector<1x16xf32>
      %48 = arith.subf %46, %47 : vector<1x16xf32>
      %49 = arith.divf %48, %43 : vector<1x16xf32>
      %cst_37 = arith.constant 1.000000e+00 : f32
      %50 = vector.broadcast %cst_37 : f32 to vector<1x16xf32>
      %51 = arith.addf %50, %49 : vector<1x16xf32>
      %52 = math.log %51 : vector<1x16xf32>
      %c0_38 = arith.constant 0 : index
      %c0_39 = arith.constant 0 : index
      %53 = vector.load %arg6[%c0_38, %c0_39] : memref<1x16xf32, #tpu.memory_space<vmem>>, vector<1x16xf32>
      tpu.vector_store %arg6[%c0_38, %c0_39], %52 {strides = array<i32>} : memref<1x16xf32, #tpu.memory_space<vmem>>, vector<1x16xf32>,
      %c0_40 = arith.constant 0 : index
      %c0_41 = arith.constant 0 : index
      %54 = vector.load %arg9[%c0_40, %c0_41] : memref<1x16xf32, #tpu.memory_space<vmem>>, vector<1x16xf32>
      %c0_42 = arith.constant 0 : index
      %c0_43 = arith.constant 0 : index
      %55 = vector.load %arg11[%c0_42, %c0_43] : memref<1x16xf32, #tpu.memory_space<vmem>>, vector<1x16xf32>
      %56 = arith.subf %54, %55 : vector<1x16xf32>
      %c0_44 = arith.constant 0 : index
      %c0_45 = arith.constant 0 : index
      %57 = vector.load %arg12[%c0_44, %c0_45] : memref<1x16xf32, #tpu.memory_space<vmem>>, vector<1x16xf32>
      %58 = arith.subf %56, %57 : vector<1x16xf32>
      %59 = arith.divf %58, %43 : vector<1x16xf32>
      %cst_46 = arith.constant 1.000000e+00 : f32
      %60 = vector.broadcast %cst_46 : f32 to vector<1x16xf32>
      %61 = arith.addf %60, %59 : vector<1x16xf32>
      %62 = math.log %61 : vector<1x16xf32>
      %c0_47 = arith.constant 0 : index
      %c0_48 = arith.constant 0 : index
      %63 = vector.load %arg7[%c0_47, %c0_48] : memref<1x16xf32, #tpu.memory_space<vmem>>, vector<1x16xf32>
      tpu.vector_store %arg7[%c0_47, %c0_48], %62 {strides = array<i32>} : memref<1x16xf32, #tpu.memory_space<vmem>>, vector<1x16xf32>,
    } else {
    }
    return
  }
  func.func @transform_0(%arg0: i32, %arg1: i32) -> (i32, i32) {
    %c0_i32 = arith.constant 0 : i32
    %c0_i32_0 = arith.constant 0 : i32
    return %c0_i32, %arg0 : i32, i32
  }
  func.func @transform_1(%arg0: i32, %arg1: i32) -> (i32, i32) {
    %c0_i32 = arith.constant 0 : i32
    %c0_i32_0 = arith.constant 0 : i32
    return %c0_i32, %arg0 : i32, i32
  }
  func.func @transform_2(%arg0: i32, %arg1: i32) -> (i32, i32) {
    %c0_i32 = arith.constant 0 : i32
    %c0_i32_0 = arith.constant 0 : i32
    return %arg1, %c0_i32 : i32, i32
  }
  func.func @transform_3(%arg0: i32, %arg1: i32) -> (i32, i32) {
    %c0_i32 = arith.constant 0 : i32
    %c0_i32_0 = arith.constant 0 : i32
    return %arg1, %c0_i32 : i32, i32
  }
  func.func @transform_4(%arg0: i32, %arg1: i32) -> (i32, i32) {
    %c0_i32 = arith.constant 0 : i32
    %c0_i32_0 = arith.constant 0 : i32
    return %arg0, %c0_i32 : i32, i32
  }
  func.func @transform_5(%arg0: i32, %arg1: i32) -> (i32, i32) {
    %c0_i32 = arith.constant 0 : i32
    %c0_i32_0 = arith.constant 0 : i32
    return %arg0, %c0_i32 : i32, i32
  }
}

</mosaic_0001>

<llo_original>
// kernel: tpu_custom_call.1
$region0: #{tpu_custom_call.1}
  #allocation0 [shape = 'u32[]', space=smem, size = 0x4, offset = 0x4, fixed_abs, tag = 'smem constant byte address 0x4 - core index']
  #allocation1 [shape = 'u32[144,128]{1,0:T(1,128)}', space=vmem, size = 0x12000, scoped, tag = 'internal scratch']
  #allocation2 [shape = 'f32[1,16]{1,0:T(1,128)}', space=vmem, size = 0x200, scoped, tag = 'scratch operand']
  #allocation3 [shape = 'f32[1,16]{1,0:T(1,128)}', space=vmem, size = 0x200, scoped, tag = 'scratch operand']
  #allocation4 [shape = 'f32[1,16]{1,0:T(1,128)}', space=vmem, size = 0x200, scoped, tag = 'scratch operand']
  #allocation5 [shape = 'f32[1,16]{1,0:T(1,128)}', space=vmem, size = 0x200, scoped, tag = 'scratch operand']
  #allocation6 [shape = 'f32[1,16]{1,0:T(1,128)}', space=vmem, size = 0x200, scoped, tag = 'scratch operand']
  %s0 = inlined_call_operand.vmem [shape: bf16[32,16], index: 0, kind: input, shape index: {}]
  %s1 = inlined_call_operand.vmem [shape: bf16[32,16], index: 1, kind: input, shape index: {}]
  %s2 = inlined_call_operand.vmem [shape: bf16[16,32], index: 2, kind: input, shape index: {}]
  %s3 = inlined_call_operand.vmem [shape: bf16[16,32], index: 3, kind: input, shape index: {}]
  %s4 = inlined_call_operand.hbm [shape: f32[1,16], index: 4, kind: output, shape index: {0}]
  %s5 = inlined_call_operand.hbm [shape: f32[1,16], index: 5, kind: output, shape index: {1}]
  %6 = xla_tuple %s4, %s5
  %s7 = sld [smem:[#allocation0]]
  $region46: #{tpu_custom_call.1} parent=0
    _
  %s9 = ssub.s32 1, %s7
  %s10 = scalar_select 0, %s9, %s7
  $region1: #{tpu_custom_call.1} parent=0
    #allocation7 [shape = 'u8[512]{0}', space=vmem, size = 0x400, scoped, tag = 'output window, operand 0, single buffered']
    #allocation8 [shape = 's32[1]{0}', space=sflag, size = 0x4, scoped, tag = 'scoped memory for tpu_custom_call.1']
    #allocation9 [shape = 'u8[512]{0}', space=vmem, size = 0x400, scoped, tag = 'output window, operand 1, single buffered']
    #allocation10 [shape = 's32[1]{0}', space=sflag, size = 0x4, scoped, tag = 'scoped memory for tpu_custom_call.1']
    %11 = vsyncpa [#allocation8], 0
    %12 = vsyncpa [#allocation10], 0
    // Predicated region
    $region2: #{tpu_custom_call.1} parent=1 // pred_check
      _
    $region3: #{tpu_custom_call.1} parent=1 // pred_check_branch
      %14 = sbr.rel (0) target = $region5
    $region4: #{tpu_custom_call.1} parent=1 // pred_region
      _
    $region5: #{tpu_custom_call.1} parent=1 // pred_fallthru
      _
    // Predicated region
    $region6: #{tpu_custom_call.1} parent=1 // pred_check
      _
    $region7: #{tpu_custom_call.1} parent=1 // pred_check_branch
      %16 = sbr.rel (0) target = $region9
    $region8: #{tpu_custom_call.1} parent=1 // pred_region
      _
    $region9: #{tpu_custom_call.1} parent=1 // pred_fallthru
      _
    // Predicated region
    $region10: #{tpu_custom_call.1} parent=1 // pred_check
      _
    $region11: #{tpu_custom_call.1} parent=1 // pred_check_branch
      %18 = sbr.rel (0) target = $region13
    $region12: #{tpu_custom_call.1} parent=1 // pred_region
      _
    $region13: #{tpu_custom_call.1} parent=1 // pred_fallthru
      _
    // Predicated region
    $region14: #{tpu_custom_call.1} parent=1 // pred_check
      _
    $region15: #{tpu_custom_call.1} parent=1 // pred_check_branch
      %20 = sbr.rel (0) target = $region17
    $region16: #{tpu_custom_call.1} parent=1 // pred_region
      _
    $region17: #{tpu_custom_call.1} parent=1 // pred_fallthru
      _
    %p22 = scmp.eq.s32.totalorder 0, 0
    // Predicated region
    $region18: #{tpu_custom_call.1} parent=1 // pred_check
      %p23 = pneg %p22
    $region19: #{tpu_custom_call.1} parent=1 // pred_check_branch
      %25 = sbr.rel (%p23) target = $region21
    $region20: #{tpu_custom_call.1} parent=1 // pred_region
      %vm26 = vcmask 122880
      %27 = vst.msk [vmem:[#allocation2] sm:$0x1] %vm26, 0.0
      %28 = vst.msk [vmem:[#allocation3] sm:$0x1] %vm26, 0.0
    $region21: #{tpu_custom_call.1} parent=1 // pred_fallthru
      _
    %v29 = vld [vmem:[%s0] sm:$0xf]
    %v30 = vld [vmem:[%s0 + $0x4] sm:$0xf]
    %v31 = vld [vmem:[%s0 + $0x8] sm:$0xf]
    %v32 = vld [vmem:[%s0 + $0xc] sm:$0xf]
    %v33 = vld [vmem:[%s1] sm:$0xf]
    %v34 = vld [vmem:[%s1 + $0x4] sm:$0xf]
    %v35 = vld [vmem:[%s1 + $0x8] sm:$0xf]
    %v36 = vld [vmem:[%s1 + $0xc] sm:$0xf]
    %v37 = vld [vmem:[%s2] sm:$0xf]
    %v38 = vld [vmem:[%s2 + $0x4] sm:$0xf]
    %v39 = vld [vmem:[%s3] sm:$0xf]
    %v40 = vld [vmem:[%s3 + $0x4] sm:$0xf]
    %v43 = vunpack.c.l.b16 %v37
    %v44 = vunpack.c.l.b16 %v38
    %v45 = vpack.c.b16 %v44, %v43
    %v50 = vunpack.c.l.b16 %v29
    %v51 = vunpack.c.l.b16 %v30
    %v52 = vunpack.c.l.b16 %v31
    %v53 = vunpack.c.l.b16 %v32
    %v54 = vpack.c.b16 %v51, %v50
    %v55 = vpack.c.b16 %v53, %v52
    %vm58 = vcmask 261120
    %v60 = vsel %vm58, %v45, 0
    %62 = vmatprep.subr.bf16.mxu0 0
    %63 = vmatpush1.bf16.msra.mxu0 %v54
    %64 = vmatprep.subr.bf16.mxu0 0
    %65 = vmatpush1.bf16.msra.mxu0 %v55
    %66 = vmatprep.subr.bf16.mxu0 0
    %67 = vmatpush1.bf16.msra.mxu0 0
    %68 = vmatprep.subr.bf16.mxu0 0
    %69 = vmatpush1.bf16.msra.mxu0 0
    %70 = vmatprep.subr.bf16.mxu0 0
    %71 = vmatpush1.bf16.msra.mxu0 0
    %72 = vmatprep.subr.bf16.mxu0 0
    %73 = vmatpush1.bf16.msra.mxu0 0
    %74 = vmatprep.subr.bf16.mxu0 0
    %75 = vmatpush1.bf16.msra.mxu0 0
    %76 = vmatprep.subr.bf16.mxu0 0
    %77 = vmatpush1.bf16.msra.mxu0 0
    %78 = vmatprep.subr.bf16.mxu0 0
    %79 = vmatpush1.bf16.msra.mxu0 0
    %80 = vmatprep.subr.bf16.mxu0 0
    %81 = vmatpush1.bf16.msra.mxu0 0
    %82 = vmatprep.subr.bf16.mxu0 0
    %83 = vmatpush1.bf16.msra.mxu0 0
    %84 = vmatprep.subr.bf16.mxu0 0
    %85 = vmatpush1.bf16.msra.mxu0 0
    %86 = vmatprep.subr.bf16.mxu0 0
    %87 = vmatpush1.bf16.msra.mxu0 0
    %88 = vmatprep.subr.bf16.mxu0 0
    %89 = vmatpush1.bf16.msra.mxu0 0
    %90 = vmatprep.subr.bf16.mxu0 0
    %91 = vmatpush1.bf16.msra.mxu0 0
    %92 = vmatprep.subr.bf16.mxu0 0
    %93 = vmatpush1.bf16.msra.mxu0 0
    %94 = vmatprep.mubr.bf16.mxu0 0
    %95 = vmatmul.mubr.bf16.gmra.mrb[0].mxu0 %v60
    %v96 = vpop.f32.mrb[0].mxu0
    %v97 = vadd.f32 0.0, %v96
    %v98 = vpop.f32.mrb[0].mxu0
    %v99 = vpop.f32.mrb[0].mxu0
    %v100 = vadd.f32 0.0, %v99
    %v101 = vpop.f32.mrb[0].mxu0
    %102 = vdwg.mxu0
    %v105 = vunpack.c.l.b16 %v39
    %v106 = vunpack.c.l.b16 %v40
    %v107 = vpack.c.b16 %v106, %v105
    %v109 = vsel %vm58, %v107, 0
    %111 = vmatprep.subr.bf16.mxu0 0
    %112 = vmatpush1.bf16.msra.mxu0 %v54
    %113 = vmatprep.subr.bf16.mxu0 0
    %114 = vmatpush1.bf16.msra.mxu0 %v55
    %115 = vmatprep.subr.bf16.mxu0 0
    %116 = vmatpush1.bf16.msra.mxu0 0
    %117 = vmatprep.subr.bf16.mxu0 0
    %118 = vmatpush1.bf16.msra.mxu0 0
    %119 = vmatprep.subr.bf16.mxu0 0
    %120 = vmatpush1.bf16.msra.mxu0 0
    %121 = vmatprep.subr.bf16.mxu0 0
    %122 = vmatpush1.bf16.msra.mxu0 0
    %123 = vmatprep.subr.bf16.mxu0 0
    %124 = vmatpush1.bf16.msra.mxu0 0
    %125 = vmatprep.subr.bf16.mxu0 0
    %126 = vmatpush1.bf16.msra.mxu0 0
    %127 = vmatprep.subr.bf16.mxu0 0
    %128 = vmatpush1.bf16.msra.mxu0 0
    %129 = vmatprep.subr.bf16.mxu0 0
    %130 = vmatpush1.bf16.msra.mxu0 0
    %131 = vmatprep.subr.bf16.mxu0 0
    %132 = vmatpush1.bf16.msra.mxu0 0
    %133 = vmatprep.subr.bf16.mxu0 0
    %134 = vmatpush1.bf16.msra.mxu0 0
    %135 = vmatprep.subr.bf16.mxu0 0
    %136 = vmatpush1.bf16.msra.mxu0 0
    %137 = vmatprep.subr.bf16.mxu0 0
    %138 = vmatpush1.bf16.msra.mxu0 0
    %139 = vmatprep.subr.bf16.mxu0 0
    %140 = vmatpush1.bf16.msra.mxu0 0
    %141 = vmatprep.subr.bf16.mxu0 0
    %142 = vmatpush1.bf16.msra.mxu0 0
    %143 = vmatprep.mubr.bf16.mxu0 0
    %144 = vmatmul.mubr.bf16.gmra.mrb[0].mxu0 %v109
    %v145 = vpop.f32.mrb[0].mxu0
    %v146 = vadd.f32 0.0, %v145
    %v147 = vpop.f32.mrb[0].mxu0
    %v148 = vpop.f32.mrb[0].mxu0
    %v149 = vadd.f32 0.0, %v148
    %v150 = vpop.f32.mrb[0].mxu0
    %151 = vdwg.mxu0
    %v156 = vunpack.c.l.b16 %v33
    %v157 = vunpack.c.l.b16 %v34
    %v158 = vunpack.c.l.b16 %v35
    %v159 = vunpack.c.l.b16 %v36
    %v160 = vpack.c.b16 %v157, %v156
    %v161 = vpack.c.b16 %v159, %v158
    %164 = vmatprep.subr.bf16.mxu0 0
    %165 = vmatpush1.bf16.msra.mxu0 %v160
    %166 = vmatprep.subr.bf16.mxu0 0
    %167 = vmatpush1.bf16.msra.mxu0 %v161
    %168 = vmatprep.subr.bf16.mxu0 0
    %169 = vmatpush1.bf16.msra.mxu0 0
    %170 = vmatprep.subr.bf16.mxu0 0
    %171 = vmatpush1.bf16.msra.mxu0 0
    %172 = vmatprep.subr.bf16.mxu0 0
    %173 = vmatpush1.bf16.msra.mxu0 0
    %174 = vmatprep.subr.bf16.mxu0 0
    %175 = vmatpush1.bf16.msra.mxu0 0
    %176 = vmatprep.subr.bf16.mxu0 0
    %177 = vmatpush1.bf16.msra.mxu0 0
    %178 = vmatprep.subr.bf16.mxu0 0
    %179 = vmatpush1.bf16.msra.mxu0 0
    %180 = vmatprep.subr.bf16.mxu0 0
    %181 = vmatpush1.bf16.msra.mxu0 0
    %182 = vmatprep.subr.bf16.mxu0 0
    %183 = vmatpush1.bf16.msra.mxu0 0
    %184 = vmatprep.subr.bf16.mxu0 0
    %185 = vmatpush1.bf16.msra.mxu0 0
    %186 = vmatprep.subr.bf16.mxu0 0
    %187 = vmatpush1.bf16.msra.mxu0 0
    %188 = vmatprep.subr.bf16.mxu0 0
    %189 = vmatpush1.bf16.msra.mxu0 0
    %190 = vmatprep.subr.bf16.mxu0 0
    %191 = vmatpush1.bf16.msra.mxu0 0
    %192 = vmatprep.subr.bf16.mxu0 0
    %193 = vmatpush1.bf16.msra.mxu0 0
    %194 = vmatprep.subr.bf16.mxu0 0
    %195 = vmatpush1.bf16.msra.mxu0 0
    %196 = vmatprep.mubr.bf16.mxu0 0
    %197 = vmatmul.mubr.bf16.gmra.mrb[0].mxu0 %v60
    %v198 = vpop.f32.mrb[0].mxu0
    %v199 = vadd.f32 0.0, %v198
    %v200 = vpop.f32.mrb[0].mxu0
    %v201 = vpop.f32.mrb[0].mxu0
    %v202 = vadd.f32 0.0, %v201
    %v203 = vpop.f32.mrb[0].mxu0
    %204 = vdwg.mxu0
    %205 = vmatprep.subr.bf16.mxu0 0
    %206 = vmatpush1.bf16.msra.mxu0 %v160
    %207 = vmatprep.subr.bf16.mxu0 0
    %208 = vmatpush1.bf16.msra.mxu0 %v161
    %209 = vmatprep.subr.bf16.mxu0 0
    %210 = vmatpush1.bf16.msra.mxu0 0
    %211 = vmatprep.subr.bf16.mxu0 0
    %212 = vmatpush1.bf16.msra.mxu0 0
    %213 = vmatprep.subr.bf16.mxu0 0
    %214 = vmatpush1.bf16.msra.mxu0 0
    %215 = vmatprep.subr.bf16.mxu0 0
    %216 = vmatpush1.bf16.msra.mxu0 0
    %217 = vmatprep.subr.bf16.mxu0 0
    %218 = vmatpush1.bf16.msra.mxu0 0
    %219 = vmatprep.subr.bf16.mxu0 0
    %220 = vmatpush1.bf16.msra.mxu0 0
    %221 = vmatprep.subr.bf16.mxu0 0
    %222 = vmatpush1.bf16.msra.mxu0 0
    %223 = vmatprep.subr.bf16.mxu0 0
    %224 = vmatpush1.bf16.msra.mxu0 0
    %225 = vmatprep.subr.bf16.mxu0 0
    %226 = vmatpush1.bf16.msra.mxu0 0
    %227 = vmatprep.subr.bf16.mxu0 0
    %228 = vmatpush1.bf16.msra.mxu0 0
    %229 = vmatprep.subr.bf16.mxu0 0
    %230 = vmatpush1.bf16.msra.mxu0 0
    %231 = vmatprep.subr.bf16.mxu0 0
    %232 = vmatpush1.bf16.msra.mxu0 0
    %233 = vmatprep.subr.bf16.mxu0 0
    %234 = vmatpush1.bf16.msra.mxu0 0
    %235 = vmatprep.subr.bf16.mxu0 0
    %236 = vmatpush1.bf16.msra.mxu0 0
    %237 = vmatprep.mubr.bf16.mxu0 0
    %238 = vmatmul.mubr.bf16.gmra.mrb[0].mxu0 %v109
    %v239 = vpop.f32.mrb[0].mxu0
    %v240 = vadd.f32 0.0, %v239
    %v241 = vpop.f32.mrb[0].mxu0
    %v242 = vpop.f32.mrb[0].mxu0
    %v243 = vadd.f32 0.0, %v242
    %v244 = vpop.f32.mrb[0].mxu0
    %245 = vdwg.mxu0
    %v246 = vmul.f32 %v97, 2.0
    %v247 = vmul.f32 %v100, 2.0
    %v248 = vmul.f32 %v246, 1.442695
    %v249 = vpow.pop %v248
    %v250 = vmul.f32 %v247, 1.442695
    %v251 = vpow.pop %v250
    %v252 = vmul.f32 %v146, 2.0
    %v253 = vmul.f32 %v149, 2.0
    %v254 = vmul.f32 %v252, 1.442695
    %v255 = vpow.pop %v254
    %v256 = vmul.f32 %v253, 1.442695
    %v257 = vpow.pop %v256
    %v258 = vmul.f32 %v199, 2.0
    %v259 = vmul.f32 %v202, 2.0
    %v260 = vmul.f32 %v258, 1.442695
    %v261 = vpow.pop %v260
    %v262 = vmul.f32 %v259, 1.442695
    %v263 = vpow.pop %v262
    %v264 = vmul.f32 %v240, 2.0
    %v265 = vmul.f32 %v243, 2.0
    %v266 = vmul.f32 %v264, 1.442695
    %v267 = vpow.pop %v266
    %v268 = vmul.f32 %v265, 1.442695
    %v269 = vpow.pop %v268
    %v270 = vadd.f32 %v249, %v255
    %v271 = vadd.f32 %v251, %v257
    %v272 = vadd.f32 %v261, %v267
    %v273 = vadd.f32 %v263, %v269
    %v274 = vld [vmem:[#allocation2] sm:$0x1]
    %vm275 = vcmask 130048
    %v276 = vsel %vm275, %v270, 0.0
    %v277 = vsel %vm275, %v271, 0.0
    %v278 = vadd.f32 %v276, %v277
    %v279 = vrot.slane %v278, 4
    %v280 = vadd.f32 %v278, %v279
    %v281 = vrot.slane %v280, 2
    %v282 = vadd.f32 %v280, %v281
    %v283 = vrot.slane %v282, 1
    %v284 = vadd.f32 %v282, %v283
    %v285 = vadd.f32 %v274, %v284
    %vm286 = vcmask 122880
    %287 = vst.msk [vmem:[#allocation2] sm:$0x1] %vm286, %v285
    %v288 = vld [vmem:[#allocation3] sm:$0x1]
    %v289 = vsel %vm275, %v272, 0.0
    %v290 = vsel %vm275, %v273, 0.0
    %v291 = vadd.f32 %v289, %v290
    %v292 = vrot.slane %v291, 4
    %v293 = vadd.f32 %v291, %v292
    %v294 = vrot.slane %v293, 2
    %v295 = vadd.f32 %v293, %v294
    %v296 = vrot.slane %v295, 1
    %v297 = vadd.f32 %v295, %v296
    %v298 = vadd.f32 %v288, %v297
    %299 = vst.msk [vmem:[#allocation3] sm:$0x1] %vm286, %v298
    %p300 = scmp.eq.s32.totalorder 0, 0
    // Predicated region
    $region22: #{tpu_custom_call.1} parent=1 // pred_check
      %p301 = pneg %p300
    $region23: #{tpu_custom_call.1} parent=1 // pred_check_branch
      %303 = sbr.rel (%p301) target = $region25
    $region24: #{tpu_custom_call.1} parent=1 // pred_region
      %v304 = vlaneseq
      %v305 = vshrl.u32 %v304, 7
      %v306 = vadd.s32 %v305, 8
      %v307 = vlaneseq
      %v308 = vand.u32 %v307, 127
      %vm309 = vcmp.eq.s32.totalorder %v305, %v308
      %vm310 = vcmp.eq.s32.totalorder %v306, %v308
      %v311 = vsel %vm309, %v249, 0.0
      %v312 = vsel %vm310, %v251, 0.0
      %v313 = vsel %vm275, %v311, 0.0
      %v314 = vsel %vm275, %v312, 0.0
      %v315 = vadd.f32 %v313, %v314
      %v316 = vrot.slane %v315, 4
      %v317 = vadd.f32 %v315, %v316
      %v318 = vrot.slane %v317, 2
      %v319 = vadd.f32 %v317, %v318
      %v320 = vrot.slane %v319, 1
      %v321 = vadd.f32 %v319, %v320
      %322 = vst.msk [vmem:[#allocation4] sm:$0x1] %vm286, %v321
      %v323 = vsel %vm309, %v267, 0.0
      %v324 = vsel %vm310, %v269, 0.0
      %v325 = vsel %vm275, %v323, 0.0
      %v326 = vsel %vm275, %v324, 0.0
      %v327 = vadd.f32 %v325, %v326
      %v328 = vrot.slane %v327, 4
      %v329 = vadd.f32 %v327, %v328
      %v330 = vrot.slane %v329, 2
      %v331 = vadd.f32 %v329, %v330
      %v332 = vrot.slane %v331, 1
      %v333 = vadd.f32 %v331, %v332
      %334 = vst.msk [vmem:[#allocation5] sm:$0x1] %vm286, %v333
      %v335 = vsel %vm309, %v255, 0.0
      %v336 = vsel %vm310, %v257, 0.0
      %v337 = vsel %vm275, %v335, 0.0
      %v338 = vsel %vm275, %v336, 0.0
      %v339 = vadd.f32 %v337, %v338
      %v340 = vrot.slane %v339, 4
      %v341 = vadd.f32 %v339, %v340
      %v342 = vrot.slane %v341, 2
      %v343 = vadd.f32 %v341, %v342
      %v344 = vrot.slane %v343, 1
      %v345 = vadd.f32 %v343, %v344
      %346 = vst.msk [vmem:[#allocation6] sm:$0x1] %vm286, %v345
    $region25: #{tpu_custom_call.1} parent=1 // pred_fallthru
      _
    // Predicated region
    $region26: #{tpu_custom_call.1} parent=1 // pred_check
      %p347 = pneg %p22
    $region27: #{tpu_custom_call.1} parent=1 // pred_check_branch
      %349 = sbr.rel (%p347) target = $region29
    $region28: #{tpu_custom_call.1} parent=1 // pred_region
      %v350 = vld [vmem:[#allocation6] sm:$0x1]
      %v351 = vld [vmem:[#allocation2] sm:$0x1]
      %v352 = vld [vmem:[#allocation4] sm:$0x1]
      %v353 = vsub.f32 %v351, %v352
      %v354 = vsub.f32 %v353, %v350
      %v355 = vrcp.pop %v350
      %v356 = vmul.f32 %v354, %v355
      %v357 = vadd.f32 %v356, 1.0
      %v358 = vlog2.pop %v357
      %v359 = vmul.f32 %v358, 0.6931472
      %360 = vst.msk [vmem:[#allocation7] sm:$0x1] %vm286, %v359
      %v361 = vld [vmem:[#allocation3] sm:$0x1]
      %v362 = vld [vmem:[#allocation5] sm:$0x1]
      %v363 = vsub.f32 %v361, %v362
      %v364 = vld [vmem:[#allocation6] sm:$0x1]
      %v365 = vsub.f32 %v363, %v364
      %v366 = vmul.f32 %v365, %v355
      %v367 = vadd.f32 %v366, 1.0
      %v368 = vlog2.pop %v367
      %v369 = vmul.f32 %v368, 0.6931472
      %370 = vst.msk [vmem:[#allocation9] sm:$0x1] %vm286, %v369
    $region29: #{tpu_custom_call.1} parent=1 // pred_fallthru
      _
    // Predicated region
    $region30: #{tpu_custom_call.1} parent=1 // pred_check
      _
    $region31: #{tpu_custom_call.1} parent=1 // pred_check_branch
      %372 = sbr.rel (0) target = $region33
    $region32: #{tpu_custom_call.1} parent=1 // pred_region
      %s374 = ssub.s32 16, 16
      %375 = vsyncadd [#allocation8], %s374
      %s377 = sshll.u32 [#allocation7], 4
      %s378 = int_to_ptr.vmem [resolvable:$true] %s377
      %380 = dma.vmem_to_hbm [thread:$0]  %s378, 16, %s4, [#allocation8]
    $region33: #{tpu_custom_call.1} parent=1 // pred_fallthru
      _
    // Predicated region
    $region34: #{tpu_custom_call.1} parent=1 // pred_check
      _
    $region35: #{tpu_custom_call.1} parent=1 // pred_check_branch
      %382 = sbr.rel (0) target = $region37
    $region36: #{tpu_custom_call.1} parent=1 // pred_region
      %s384 = ssub.s32 16, 16
      %385 = vsyncadd [#allocation10], %s384
      %s387 = sshll.u32 [#allocation9], 4
      %s388 = int_to_ptr.vmem [resolvable:$true] %s387
      %390 = dma.vmem_to_hbm [thread:$0]  %s388, 16, %s5, [#allocation10]
    $region37: #{tpu_custom_call.1} parent=1 // pred_fallthru
      _
    // Predicated region
    $region38: #{tpu_custom_call.1} parent=1 // pred_check
      _
    $region39: #{tpu_custom_call.1} parent=1 // pred_check_branch
      %392 = sbr.rel (0) target = $region41
    $region40: #{tpu_custom_call.1} parent=1 // pred_region
      %393 = dma.done [#allocation8], 16
    $region41: #{tpu_custom_call.1} parent=1 // pred_fallthru
      _
    // Predicated region
    $region42: #{tpu_custom_call.1} parent=1 // pred_check
      _
    $region43: #{tpu_custom_call.1} parent=1 // pred_check_branch
      %395 = sbr.rel (0) target = $region45
    $region44: #{tpu_custom_call.1} parent=1 // pred_region
      %396 = dma.done [#allocation10], 16
    $region45: #{tpu_custom_call.1} parent=1 // pred_fallthru
      _
    %397 = vsyncpa [#allocation8], 1
    %398 = vsyncpa [#allocation10], 1

</llo_original>
